<compile_context>
chip_gen: v7x
topology: tpu7x:2x2x1
jax: 0.10.0
libtpu: 0.0.40
codegen_flags: <defaults>
</compile_context>

<pallas_src>
import jax
import jax.numpy as jnp
from jax import lax
from jax.experimental import pallas as pl
from jax.experimental.pallas import tpu as pltpu


_LANE = 128

# Tile ceilings / budgets (bytes).  The working-set budget is chosen so the
# same config lands on v5e (16 MiB scoped default, raised explicitly below),
# v6e (32/128 MiB) and v7x (32 MiB scoped / 64 MiB physical).
_TM_MAX = 512
_TN_MAX = 256
_TK_MAX = 2048
_WORKING_SET_BUDGET = 20 * 1024 * 1024
_VMEM_LIMIT_CAP = 34 * 1024 * 1024
_RESIDENT_W_BYTES = 4 * 1024 * 1024


def _round_up(x, m):
    return ((x + m - 1) // m) * m


def _sublane_align(dtype):
    # Minimum sublane multiple for block shapes: 8 for 4-byte, 16 for 2-byte.
    return 16 if jnp.dtype(dtype).itemsize == 2 else 8


def _pick_tm(batch, align):
    """M tile: multiple of the sublane alignment (or the full dim), capped at
    _TM_MAX, and split into >=2 tiles when possible so the 'parallel' M axis
    can shard across both TensorCores on v7x (neutral on v5e/v6e)."""
    if batch > _TM_MAX:
        return _TM_MAX
    if batch >= 2 * align:
        return _round_up(pl.cdiv(batch, 2), align)
    return batch  # full dim (always a legal block shape)


def _vmem_limit(footprint_bytes):
    """Explicit scoped-VMEM limit: headroom over the double-buffered working
    set, never below the smallest per-chip default, capped for v7x headroom."""
    want = footprint_bytes * 5 // 4 + (1 << 20)
    return int(min(_VMEM_LIMIT_CAP, max(want, 16 << 20)))


# ---------------------------------------------------------------------------
# Kernels
# ---------------------------------------------------------------------------

def _project_resident_kernel(x_ref, w_ref, o_ref):
    """Weight fully VMEM-resident; one (tm, latent) output tile per grid step.

    x_ref: (tm, hidden)   activation tile
    w_ref: (latent, hidden) full weight in native nn.Linear layout (DMA'd once:
                            its block index never changes)
    o_ref: (tm, latent)
    """
    o_ref[...] = lax.dot_general(
        x_ref[...],
        w_ref[...],
        dimension_numbers=(((1,), (1,)), ((), ())),   # contract on hidden
        preferred_element_type=jnp.float32,
    ).astype(o_ref.dtype)


def _project_tiled_kernel(x_ref, w_ref, o_ref, acc_ref):
    """(M, N, K) tiled path with an f32 accumulator resident across K.

    x_ref:   (tm, tk)   activation tile
    w_ref:   (tn, tk)   weight tile in native (latent, hidden) layout
    o_ref:   (tm, tn)   output tile
    acc_ref: (tm, tn)   f32 accumulator scratch
    """
    k = pl.program_id(2)

    @pl.when(k == 0)
    def _():
        acc_ref[...] = jnp.zeros_like(acc_ref)

    # y[m, n] += sum_h x[m, h] * w[n, h]
    acc_ref[...] += lax.dot_general(
        x_ref[...],
        w_ref[...],
        dimension_numbers=(((1,), (1,)), ((), ())),
        preferred_element_type=jnp.float32,
    )

    @pl.when(k == pl.num_programs(2) - 1)
    def _():
        o_ref[...] = acc_ref[...].astype(o_ref.dtype)


# ---------------------------------------------------------------------------
# Planning
# ---------------------------------------------------------------------------

def _resident_plan(batch, hidden, latent, itemsize, align):
    """Return (tm, footprint_bytes) for the resident-weight path, or None."""
    w_bytes = latent * hidden * itemsize
    if w_bytes > _RESIDENT_W_BYTES:
        return None

    def footprint(tm):
        x = 2 * tm * hidden * itemsize      # double-buffered x tile
        o = 2 * tm * latent * itemsize      # double-buffered out tile
        w = 2 * w_bytes                     # conservatively count 2 buffers
        return x + o + w

    tm = _pick_tm(batch, align)
    while tm > align and footprint(tm) > _WORKING_SET_BUDGET:
        tm = max(align, _round_up(tm // 2, align))
        if tm == align:
            break
    if footprint(tm) > _WORKING_SET_BUDGET:
        return None
    return tm, footprint(tm)


def _tiled_plan(batch, hidden, latent, itemsize, align):
    """Return (tm, tn, tk, hidden_padded, footprint_bytes) for the tiled path."""
    tm = _pick_tm(batch, align)
    tn = latent if latent <= _TN_MAX else _TN_MAX
    if hidden <= _TK_MAX:
        tk = hidden                       # full reduction dim: legal block shape
        hidden_padded = hidden
    else:
        num_k = pl.cdiv(hidden, _TK_MAX)
        tk = _round_up(pl.cdiv(hidden, num_k), _LANE)
        hidden_padded = num_k * tk        # minimal zero-padding of reduction dim

    def footprint(tm):
        x = 2 * tm * tk * itemsize
        w = 2 * tn * tk * itemsize
        o = 2 * tm * tn * itemsize
        acc = tm * tn * 4
        return x + w + o + acc

    while tm > align and footprint(tm) > _WORKING_SET_BUDGET:
        tm = max(align, _round_up(tm // 2, align))
        if tm == align:
            break
    return tm, tn, tk, hidden_padded, footprint(tm)


# ---------------------------------------------------------------------------
# Wrapper
# ---------------------------------------------------------------------------

def orthogonal_projector(x, weight, *, use_pallas="auto"):
    """Pallas equivalent of nn.Linear(hidden, latent, bias=False): y = x @ W.T.

    Args:
      x:          (batch, hidden_dim)
      weight:     (latent_dim, hidden_dim)   native PyTorch nn.Linear layout
      use_pallas: "auto" -> bypass pallas_call for tiny problems (pure launch
                  overhead); True forces the Pallas kernel; False forces XLA.
    Returns:
      (batch, latent_dim), same dtype as x.
    """
    batch, hidden = x.shape
    latent, hidden_w = weight.shape
    if hidden != hidden_w:
        raise ValueError("weight must be (latent_dim, hidden_dim)")

    flops = 2 * batch * hidden * latent
    if use_pallas is False or (use_pallas == "auto" and flops < (1 << 20)):
        # Tiny problem: a standalone pallas_call is pure launch/DMA overhead
        # with masked narrow-lane stores; XLA's fused dot is strictly faster.
        return jnp.dot(x, weight.T, preferred_element_type=jnp.float32).astype(x.dtype)

    itemsize = jnp.dtype(x.dtype).itemsize
    align = _sublane_align(x.dtype)
    out_dtype = x.dtype

    cost = pl.CostEstimate(
        flops=flops,
        transcendentals=0,
        bytes_accessed=itemsize * (batch * hidden + latent * hidden + batch * latent),
    )

    # ---- Path A: VMEM-resident weight (common projector case) --------------
    resident = _resident_plan(batch, hidden, latent, itemsize, align)
    if resident is not None:
        tm, footprint = resident
        grid = (pl.cdiv(batch, tm),)
        return pl.pallas_call(
            _project_resident_kernel,
            out_shape=jax.ShapeDtypeStruct((batch, latent), out_dtype),
            grid_spec=pltpu.PrefetchScalarGridSpec(
                num_scalar_prefetch=0,
                grid=grid,
                in_specs=[
                    pl.BlockSpec((tm, hidden), lambda i: (i, 0)),       # x tile
                    pl.BlockSpec((latent, hidden), lambda i: (0, 0)),   # resident W
                ],
                out_specs=pl.BlockSpec((tm, latent), lambda i: (i, 0)),
            ),
            compiler_params=pltpu.CompilerParams(
                dimension_semantics=("parallel",),
                vmem_limit_bytes=_vmem_limit(footprint),
            ),
            cost_estimate=cost,
        )(x, weight)

    # ---- Path B: general (M, N, K) tiling -----------------------------------
    tm, tn, tk, hidden_p, footprint = _tiled_plan(batch, hidden, latent, itemsize, align)
    if hidden_p != hidden:
        # Zero-pad the reduction dim so tk divides it exactly; zeros contribute
        # nothing, so the result is unchanged and tk stays bounded.
        pad = hidden_p - hidden
        x = jnp.pad(x, ((0, 0), (0, pad)))
        weight = jnp.pad(weight, ((0, 0), (0, pad)))

    grid = (pl.cdiv(batch, tm), pl.cdiv(latent, tn), hidden_p // tk)

    return pl.pallas_call(
        _project_tiled_kernel,
        out_shape=jax.ShapeDtypeStruct((batch, latent), out_dtype),
        grid_spec=pltpu.PrefetchScalarGridSpec(
            num_scalar_prefetch=0,
            grid=grid,
            in_specs=[
                pl.BlockSpec((tm, tk), lambda i, j, k: (i, k)),   # x tile
                pl.BlockSpec((tn, tk), lambda i, j, k: (j, k)),   # W tile (native layout)
            ],
            out_specs=pl.BlockSpec((tm, tn), lambda i, j, k: (i, j)),
            scratch_shapes=[pltpu.VMEM((tm, tn), jnp.float32)],
        ),
        compiler_params=pltpu.CompilerParams(
            dimension_semantics=("parallel", "parallel", "arbitrary"),
            vmem_limit_bytes=_vmem_limit(footprint),
        ),
        cost_estimate=cost,
    )(x, weight)


if __name__ == "__main__":
    key = jax.random.PRNGKey(0)
    k1, k2, k3, k4 = jax.random.split(key, 4)

    # --- Case 1: module-native small shapes (hidden_dim=32, latent_dim=16) ---
    # Exercises the VMEM-resident-weight path (Pallas forced: "auto" would
    # correctly bypass a problem this tiny).
    batch, hidden_dim, latent_dim = 8, 32, 16
    x = jax.random.normal(k1, (batch, hidden_dim), dtype=jnp.float32)
    bound = 1.0 / jnp.sqrt(jnp.float32(hidden_dim))
    w = jax.random.uniform(k2, (latent_dim, hidden_dim),
                           minval=-bound, maxval=bound, dtype=jnp.float32)

    y = jax.block_until_ready(orthogonal_projector(x, w, use_pallas=True))
    y_ref = x @ w.T
    assert y.shape == (batch, latent_dim)
    assert jnp.allclose(y, y_ref, atol=1e-5, rtol=1e-5)

    # --- Case 2: exercises the tiled path (K padding, ragged N, M split) -----
    b2, h2, l2 = 96, 4200, 320
    x2 = jax.random.normal(k3, (b2, h2), dtype=jnp.float32)
    bound2 = 1.0 / jnp.sqrt(jnp.float32(h2))
    w2 = jax.random.uniform(k4, (l2, h2),
                            minval=-bound2, maxval=bound2, dtype=jnp.float32)

    y2 = jax.block_until_ready(orthogonal_projector(x2, w2))
    y2_ref = jnp.dot(x2, w2.T, precision=lax.Precision.HIGHEST)
    assert y2.shape == (b2, l2)
    assert jnp.allclose(y2, y2_ref, atol=1e-4, rtol=1e-4)

    print("KERNEL_OK")
</pallas_src>

<mosaic_0001>
module attributes {stable_mosaic.version = 11 : i64} {
  func.func @_project_resident_kernel(%arg0: i32, %arg1: memref<8x32xf32, #tpu.memory_space<vmem>>, %arg2: memref<16x32xf32, #tpu.memory_space<vmem>>, %arg3: memref<8x16xf32, #tpu.memory_space<vmem>>) attributes {dimension_semantics = [#tpu.dimension_semantics<parallel>], iteration_bounds = array<i64: 1>, scalar_prefetch = 0 : i64, scratch_operands = 0 : i64, tpu.core_type = #tpu.core_type<tc>, window_params = [{transform_indices = @transform_0, window_bounds = array<i64: 8, 32>}, {pipeline_mode = #tpu.pipeline_mode<synchronous>, transform_indices = @transform_1, window_bounds = array<i64: 16, 32>}, {transform_indices = @transform_2, window_bounds = array<i64: 8, 16>}]} {
    %c0 = arith.constant 0 : index
    %c0_0 = arith.constant 0 : index
    %0 = vector.load %arg1[%c0, %c0_0] : memref<8x32xf32, #tpu.memory_space<vmem>>, vector<8x32xf32>
    %c0_1 = arith.constant 0 : index
    %c0_2 = arith.constant 0 : index
    %1 = vector.load %arg2[%c0_1, %c0_2] : memref<16x32xf32, #tpu.memory_space<vmem>>, vector<16x32xf32>
    %cst = arith.constant dense<0.000000e+00> : vector<8x16xf32>
    %2 = tpu.matmul %0, %1, %cst {dimension_numbers = #tpu.dot_dimension_numbers<[1], [1], [0], [0], [0, 0, 1, 0], [], []>} : vector<8x32xf32>, vector<16x32xf32>, vector<8x16xf32> -> vector<8x16xf32>
    %c0_3 = arith.constant 0 : index
    %c0_4 = arith.constant 0 : index
    %3 = vector.load %arg3[%c0_3, %c0_4] : memref<8x16xf32, #tpu.memory_space<vmem>>, vector<8x16xf32>
    tpu.vector_store %arg3[%c0_3, %c0_4], %2 {strides = array<i32>} : memref<8x16xf32, #tpu.memory_space<vmem>>, vector<8x16xf32>,
    return
  }
  func.func @transform_0(%arg0: i32) -> (i32, i32) {
    %c0_i32 = arith.constant 0 : i32
    %c0_i32_0 = arith.constant 0 : i32
    return %arg0, %c0_i32 : i32, i32
  }
  func.func @transform_1(%arg0: i32) -> (i32, i32) {
    %c0_i32 = arith.constant 0 : i32
    %c0_i32_0 = arith.constant 0 : i32
    %c0_i32_1 = arith.constant 0 : i32
    return %c0_i32, %c0_i32_0 : i32, i32
  }
  func.func @transform_2(%arg0: i32) -> (i32, i32) {
    %c0_i32 = arith.constant 0 : i32
    %c0_i32_0 = arith.constant 0 : i32
    return %arg0, %c0_i32 : i32, i32
  }
}

</mosaic_0001>

<llo_original>
// kernel: tpu_custom_call.1
$region0: #{tpu_custom_call.1}
  #allocation0 [shape = 'u32[]', space=smem, size = 0x4, offset = 0x4, fixed_abs, tag = 'smem constant byte address 0x4 - core index']
  #allocation1 [shape = 'u32[144,128]{1,0:T(1,128)}', space=vmem, size = 0x12000, scoped, tag = 'internal scratch']
  %s0 = inlined_call_operand.hbm [shape: f32[8,32], index: 0, kind: input, shape index: {}]
  %s1 = inlined_call_operand.hbm [shape: f32[16,32], index: 1, kind: input, shape index: {}]
  %s2 = inlined_call_operand.hbm [shape: f32[8,16], index: 2, kind: output, shape index: {}]
  %s3 = sld [smem:[#allocation0]]
  $region26: #{tpu_custom_call.1} parent=0
    _
  %s5 = ssub.s32 1, %s3
  %s6 = scalar_select 0, %s5, %s3
  $region1: #{tpu_custom_call.1} parent=0
    #allocation2 [shape = 'u8[4096]{0}', space=vmem, size = 0x1000, scoped, tag = 'input window, operand 0, single buffered']
    #allocation3 [shape = 's32[1]{0}', space=sflag, size = 0x4, scoped, tag = 'scoped memory for tpu_custom_call.1']
    #allocation4 [shape = 's32[1]{0}', space=sflag, size = 0x4, scoped, tag = 'scoped memory for tpu_custom_call.1']
    #allocation5 [shape = 'u8[8192]{0}', space=vmem, size = 0x2000, scoped, tag = 'input window, operand 1, single buffered']
    #allocation6 [shape = 's32[1]{0}', space=sflag, size = 0x4, scoped, tag = 'scoped memory for tpu_custom_call.1']
    #allocation7 [shape = 'u8[4096]{0}', space=vmem, size = 0x1000, scoped, tag = 'output window, operand 0, single buffered']
    %7 = vsyncpa [#allocation3], 0
    %8 = vsyncpa [#allocation6], 0
    %9 = vsyncpa [#allocation4], 0
    // Predicated region
    $region2: #{tpu_custom_call.1} parent=1 // pred_check
      _
    $region3: #{tpu_custom_call.1} parent=1 // pred_check_branch
      %11 = sbr.rel (0) target = $region5
    $region4: #{tpu_custom_call.1} parent=1 // pred_region
      %s13 = ssub.s32 128, 128
      %14 = vsyncadd [#allocation3], %s13
      %s16 = sshll.u32 [#allocation2], 4
      %s17 = int_to_ptr.vmem [resolvable:$true] %s16
      %19 = dma.hbm_to_vmem [thread:$0]  %s0, 128, %s17, [#allocation3]
    $region5: #{tpu_custom_call.1} parent=1 // pred_fallthru
      _
    // Predicated region
    $region6: #{tpu_custom_call.1} parent=1 // pred_check
      _
    $region7: #{tpu_custom_call.1} parent=1 // pred_check_branch
      %21 = sbr.rel (0) target = $region9
    $region8: #{tpu_custom_call.1} parent=1 // pred_region
      %s23 = ssub.s32 256, 256
      %24 = vsyncadd [#allocation6], %s23
      %s25 = sshll.u32 [#allocation5], 4
      %s26 = int_to_ptr.vmem [resolvable:$true] %s25
      %31 = dma.hbm_to_vmem [thread:$0]  %s1, 256, %s26, [#allocation6], 128, 128, 8
    $region9: #{tpu_custom_call.1} parent=1 // pred_fallthru
      _
    // Predicated region
    $region10: #{tpu_custom_call.1} parent=1 // pred_check
      _
    $region11: #{tpu_custom_call.1} parent=1 // pred_check_branch
      %33 = sbr.rel (0) target = $region13
    $region12: #{tpu_custom_call.1} parent=1 // pred_region
      %34 = dma.done [#allocation3], 128
    $region13: #{tpu_custom_call.1} parent=1 // pred_fallthru
      _
    // Predicated region
    $region14: #{tpu_custom_call.1} parent=1 // pred_check
      _
    $region15: #{tpu_custom_call.1} parent=1 // pred_check_branch
      %36 = sbr.rel (0) target = $region17
    $region16: #{tpu_custom_call.1} parent=1 // pred_region
      %37 = dma.done [#allocation6], 256
    $region17: #{tpu_custom_call.1} parent=1 // pred_fallthru
      _
    %v38 = vld [vmem:[#allocation2] sm:$0xff]
    %v39 = vld [vmem:[#allocation5] sm:$0xff]
    %v40 = vld [vmem:[#allocation5 + $0x8] sm:$0xff]
    %vm41 = vcmask 261120
    %v43 = vsel %vm41, %v38, 0
    %v46 = vsel %vm41, %v39, 0
    %v49 = vsel %vm41, %v40, 0
    %51 = vmatprep.subr.mxu0 0.0
    %52 = vmatpush1.xpose.msra.mxu0 %v46
    %53 = vmatprep.subr.mxu0 0.0
    %54 = vmatpush1.xpose.msra.mxu0 %v49
    %55 = vmatprep.subr.mxu0 0.0
    %56 = vmatpush1.xpose.msra.mxu0 0.0
    %57 = vmatprep.subr.mxu0 0.0
    %58 = vmatpush1.xpose.msra.mxu0 0.0
    %59 = vmatprep.subr.mxu0 0.0
    %60 = vmatpush1.xpose.msra.mxu0 0.0
    %61 = vmatprep.subr.mxu0 0.0
    %62 = vmatpush1.xpose.msra.mxu0 0.0
    %63 = vmatprep.subr.mxu0 0.0
    %64 = vmatpush1.xpose.msra.mxu0 0.0
    %65 = vmatprep.subr.mxu0 0.0
    %66 = vmatpush1.xpose.msra.mxu0 0.0
    %67 = vmatprep.subr.mxu0 0.0
    %68 = vmatpush1.xpose.msra.mxu0 0.0
    %69 = vmatprep.subr.mxu0 0.0
    %70 = vmatpush1.xpose.msra.mxu0 0.0
    %71 = vmatprep.subr.mxu0 0.0
    %72 = vmatpush1.xpose.msra.mxu0 0.0
    %73 = vmatprep.subr.mxu0 0.0
    %74 = vmatpush1.xpose.msra.mxu0 0.0
    %75 = vmatprep.subr.mxu0 0.0
    %76 = vmatpush1.xpose.msra.mxu0 0.0
    %77 = vmatprep.subr.mxu0 0.0
    %78 = vmatpush1.xpose.msra.mxu0 0.0
    %79 = vmatprep.subr.mxu0 0.0
    %80 = vmatpush1.xpose.msra.mxu0 0.0
    %81 = vmatprep.subr.mxu0 0.0
    %82 = vmatpush1.xpose.msra.mxu0 0.0
    %83 = vmatprep.subr.mxu0 0.0
    %84 = vmatpush1.xpose.msra.mxu0 0.0
    %85 = vmatprep.subr.mxu0 0.0
    %86 = vmatpush1.xpose.msra.mxu0 0.0
    %87 = vmatprep.subr.mxu0 0.0
    %88 = vmatpush1.xpose.msra.mxu0 0.0
    %89 = vmatprep.subr.mxu0 0.0
    %90 = vmatpush1.xpose.msra.mxu0 0.0
    %91 = vmatprep.subr.mxu0 0.0
    %92 = vmatpush1.xpose.msra.mxu0 0.0
    %93 = vmatprep.subr.mxu0 0.0
    %94 = vmatpush1.xpose.msra.mxu0 0.0
    %95 = vmatprep.subr.mxu0 0.0
    %96 = vmatpush1.xpose.msra.mxu0 0.0
    %97 = vmatprep.subr.mxu0 0.0
    %98 = vmatpush1.xpose.msra.mxu0 0.0
    %99 = vmatprep.subr.mxu0 0.0
    %100 = vmatpush1.xpose.msra.mxu0 0.0
    %101 = vmatprep.subr.mxu0 0.0
    %102 = vmatpush1.xpose.msra.mxu0 0.0
    %103 = vmatprep.subr.mxu0 0.0
    %104 = vmatpush1.xpose.msra.mxu0 0.0
    %105 = vmatprep.subr.mxu0 0.0
    %106 = vmatpush1.xpose.msra.mxu0 0.0
    %107 = vmatprep.subr.mxu0 0.0
    %108 = vmatpush1.xpose.msra.mxu0 0.0
    %109 = vmatprep.subr.mxu0 0.0
    %110 = vmatpush1.xpose.msra.mxu0 0.0
    %111 = vmatprep.subr.mxu0 0.0
    %112 = vmatpush1.xpose.msra.mxu0 0.0
    %113 = vmatprep.subr.mxu0 0.0
    %114 = vmatpush1.xpose.msra.mxu0 0.0
    %115 = vmatprep.mubr.f32.mxu0 0.0
    %116 = vmatmul.mubr.f32.gmra.mrb[0].mxu0 %v43
    %v117 = vpop.f32.mrb[0].mxu0
    %v118 = vadd.f32 0.0, %v117
    %v119 = vpop.f32.mrb[0].mxu0
    %120 = vdwg.mxu0
    %vm121 = vcmask 130048
    %122 = vst.msk [vmem:[#allocation7] sm:$0xff] %vm121, %v118
    // Predicated region
    $region18: #{tpu_custom_call.1} parent=1 // pred_check
      _
    $region19: #{tpu_custom_call.1} parent=1 // pred_check_branch
      %124 = sbr.rel (0) target = $region21
    $region20: #{tpu_custom_call.1} parent=1 // pred_region
      %s126 = ssub.s32 128, 128
      %127 = vsyncadd [#allocation4], %s126
      %s129 = sshll.u32 [#allocation7], 4
      %s130 = int_to_ptr.vmem [resolvable:$true] %s129
      %132 = dma.vmem_to_hbm [thread:$0]  %s130, 128, %s2, [#allocation4]
    $region21: #{tpu_custom_call.1} parent=1 // pred_fallthru
      _
    // Predicated region
    $region22: #{tpu_custom_call.1} parent=1 // pred_check
      _
    $region23: #{tpu_custom_call.1} parent=1 // pred_check_branch
      %134 = sbr.rel (0) target = $region25
    $region24: #{tpu_custom_call.1} parent=1 // pred_region
      %135 = dma.done [#allocation4], 128
    $region25: #{tpu_custom_call.1} parent=1 // pred_fallthru
      _
    %136 = vsyncpa [#allocation3], 1
    %137 = vsyncpa [#allocation6], 1
    %138 = vsyncpa [#allocation4], 1

</llo_original>
